<compile_context>
chip_gen: v7x
topology: tpu7x:2x2x1
jax: 0.10.0
libtpu: 0.0.40
codegen_flags: <defaults>
</compile_context>

<pallas_src>
import jax
import jax.numpy as jnp
from jax.experimental import pallas as pl
from jax.experimental.pallas import tpu as pltpu


def _make_decompress_kernel(compute_dtype):
    def kernel(w_ref, scale_ref, zp_ref, o_ref):
        # uint8 weight tile -> compute dtype, exact (w - zp) * s, cast to out.
        w = w_ref[...].astype(compute_dtype)          # (bo, bi)
        zp = zp_ref[...].astype(compute_dtype)        # (bo, 1)  exact (u8 values)
        s = scale_ref[...].astype(compute_dtype)      # (bo, 1)
        o_ref[...] = ((w - zp) * s).astype(o_ref.dtype)
    return kernel


def _align_down(x, m):
    return max(m, (x // m) * m)


def decompress_asymmetric(weight_u8, scale, zero_point, result_dtype, result_shape,
                          *, block_o=256, block_i=8192, vmem_limit_bytes=None):
    """weight_u8: uint8 [O, I]; scale, zero_point: per-output-channel (O,) or (O, 1)."""
    O, I = weight_u8.shape

    # Per-channel params in f32 (converted to compute dtype inside the kernel).
    scale_f32 = scale.astype(jnp.float32).reshape(O, 1)
    zp_f32 = zero_point.astype(jnp.float32).reshape(O, 1)

    # bf16 math for bf16 outputs (u8 and u8-zp exact in bf16); f32 otherwise.
    out_dtype = jnp.dtype(result_dtype)
    compute_dtype = jnp.bfloat16 if out_dtype == jnp.dtype(jnp.bfloat16) else jnp.float32

    # Clamp / align block sizes: multiples of 32 rows (u8 sublane tile) and
    # 128 lanes, or the full dimension when smaller than the block.
    bo = O if block_o >= O else _align_down(block_o, 32)
    bi = I if block_i >= I else _align_down(block_i, 128)

    # Guarantee >=2 grid steps when possible so both v7x TensorCores
    # ("parallel" axes) get work; prefer splitting the lane axis.
    if pl.cdiv(O, bo) * pl.cdiv(I, bi) < 2:
        if I >= 256:
            bi = _align_down(max(128, I // 2), 128)
        elif O >= 64:
            bo = _align_down(max(32, O // 2), 32)

    grid = (pl.cdiv(O, bo), pl.cdiv(I, bi))

    # Honest VMEM in-flight estimate:
    #   double-buffered u8 input + output tiles, full-tile compute-dtype
    #   temporaries inside the body, and two 128-lane-padded (bo,1) f32 params
    #   (double-buffered).
    out_isz = out_dtype.itemsize
    comp_isz = jnp.dtype(compute_dtype).itemsize
    inflight = (2 * bo * bi * 1
                + 2 * bo * bi * out_isz
                + 2 * bo * bi * comp_isz
                + 2 * 2 * bo * 128 * 4)
    if vmem_limit_bytes is None and inflight > (12 << 20):
        try:
            phys_vmem = pltpu.get_tpu_info().vmem_capacity_bytes
        except Exception:
            phys_vmem = 64 << 20  # conservative: v7x physical VMEM
        cap = max(16 << 20, phys_vmem - (16 << 20))  # leave Mosaic scratch headroom
        vmem_limit_bytes = min(inflight + (8 << 20), cap)

    cp_kwargs = dict(dimension_semantics=("parallel", "parallel"))
    if vmem_limit_bytes is not None:
        cp_kwargs["vmem_limit_bytes"] = int(vmem_limit_bytes)

    out = pl.pallas_call(
        _make_decompress_kernel(compute_dtype),
        out_shape=jax.ShapeDtypeStruct((O, I), result_dtype),
        grid_spec=pltpu.PrefetchScalarGridSpec(
            num_scalar_prefetch=0,
            grid=grid,
            in_specs=[
                # weight tile: streams over both grid axes.
                pl.BlockSpec((bo, bi), lambda i, j: (i, j)),
                # scale / zero_point: depend only on the O index -> same tiny
                # block reused across the inner I axis (no redundant DMAs).
                pl.BlockSpec((bo, 1), lambda i, j: (i, 0)),
                pl.BlockSpec((bo, 1), lambda i, j: (i, 0)),
            ],
            out_specs=pl.BlockSpec((bo, bi), lambda i, j: (i, j)),
        ),
        compiler_params=pltpu.CompilerParams(**cp_kwargs),
    )(weight_u8, scale_f32, zp_f32)

    # Reshape to result_shape is metadata-only glue (matches torch .reshape).
    return out.reshape(result_shape)


class INT8AsymmetricWeightsDecompressor:
    """JAX/Pallas mirror of the PyTorch module (forward with
    return_decompressed_only=True)."""

    def __init__(self, scale, zero_point, result_dtype, result_shape,
                 use_int8_matmul=False, *, block_o=256, block_i=8192):
        self.num_bits = 8
        self.quantization_mode = "asymmetric"
        self.scale = scale
        self.zero_point = zero_point
        self.result_dtype = result_dtype
        self.result_shape = result_shape
        # TODO(synk): use_int8_matmul should route to a fused int8-MXU matmul
        # consumer on v5e/v6e (no standalone dequant); kept for API parity.
        self.use_int8_matmul = use_int8_matmul
        self.block_o = block_o
        self.block_i = block_i

    def pack_weight(self, weight):
        return weight.astype(jnp.uint8)

    def __call__(self, packed_weight):
        return decompress_asymmetric(
            packed_weight, self.scale, self.zero_point,
            self.result_dtype, self.result_shape,
            block_o=self.block_o, block_i=self.block_i)


if __name__ == "__main__":
    key = jax.random.PRNGKey(0)
    k_w, k_s, k_z = jax.random.split(key, 3)

    # Small synthetic linear-weight shape: O=64 output channels, I=256 inputs.
    # Small explicit blocks exercise the 2-D grid path (2 x 2 tiles);
    # production defaults are block_o=256, block_i=8192.
    O, I = 64, 256
    result_dtype = jnp.bfloat16
    result_shape = (O, I)

    weight_u8 = jax.random.randint(k_w, (O, I), 0, 256, dtype=jnp.int32).astype(jnp.uint8)
    scale = (jax.random.uniform(k_s, (O, 1), jnp.float32) * 0.02 + 0.001)
    zero_point = jax.random.randint(k_z, (O, 1), 0, 256, dtype=jnp.int32).astype(jnp.uint8)

    decompressor = INT8AsymmetricWeightsDecompressor(
        scale, zero_point, result_dtype, result_shape,
        block_o=32, block_i=128)

    packed = decompressor.pack_weight(weight_u8)
    result = decompressor(packed)
    jax.block_until_ready(result)

    # Reference check in plain JAX (original (w - zp) * s formulation).
    ref = ((weight_u8.astype(jnp.float32) - zero_point.astype(jnp.float32))
           * scale).reshape(result_shape).astype(result_dtype)
    assert result.shape == result_shape and result.dtype == result_dtype
    assert jnp.allclose(result.astype(jnp.float32), ref.astype(jnp.float32),
                        atol=2e-2, rtol=2e-2)

    # Also exercise the default-block / grid-collapse-guard path once.
    full = decompress_asymmetric(weight_u8, scale, zero_point,
                                 result_dtype, result_shape)
    jax.block_until_ready(full)
    assert jnp.allclose(full.astype(jnp.float32), ref.astype(jnp.float32),
                        atol=2e-2, rtol=2e-2)

    print("KERNEL_OK")
</pallas_src>

<mosaic_0001>
module attributes {stable_mosaic.version = 11 : i64} {
  func.func @kernel(%arg0: i32, %arg1: i32, %arg2: memref<32x128xi8, #tpu.memory_space<vmem>>, %arg3: memref<32x1xf32, #tpu.memory_space<vmem>>, %arg4: memref<32x1xf32, #tpu.memory_space<vmem>>, %arg5: memref<32x128xbf16, #tpu.memory_space<vmem>>) attributes {dimension_semantics = [#tpu.dimension_semantics<parallel>, #tpu.dimension_semantics<parallel>], iteration_bounds = array<i64: 2, 2>, scalar_prefetch = 0 : i64, scratch_operands = 0 : i64, tpu.core_type = #tpu.core_type<tc>, window_params = [{transform_indices = @transform_0, window_bounds = array<i64: 32, 128>}, {transform_indices = @transform_1, window_bounds = array<i64: 32, 1>}, {transform_indices = @transform_2, window_bounds = array<i64: 32, 1>}, {transform_indices = @transform_3, window_bounds = array<i64: 32, 128>}]} {
    %c0 = arith.constant 0 : index
    %c0_0 = arith.constant 0 : index
    %0 = vector.load %arg2[%c0, %c0_0] : memref<32x128xi8, #tpu.memory_space<vmem>>, vector<32x128xi8>
    %1 = arith.uitofp %0 : vector<32x128xi8> to vector<32x128xbf16>
    %c0_1 = arith.constant 0 : index
    %c0_2 = arith.constant 0 : index
    %2 = vector.load %arg4[%c0_1, %c0_2] : memref<32x1xf32, #tpu.memory_space<vmem>>, vector<32x1xf32>
    %3 = arith.truncf %2 : vector<32x1xf32> to vector<32x1xbf16>
    %c0_3 = arith.constant 0 : index
    %c0_4 = arith.constant 0 : index
    %4 = vector.load %arg3[%c0_3, %c0_4] : memref<32x1xf32, #tpu.memory_space<vmem>>, vector<32x1xf32>
    %5 = arith.truncf %4 : vector<32x1xf32> to vector<32x1xbf16>
    %6 = vector.broadcast %3 : vector<32x1xbf16> to vector<32x128xbf16>
    %7 = arith.subf %1, %6 : vector<32x128xbf16>
    %8 = vector.broadcast %5 : vector<32x1xbf16> to vector<32x128xbf16>
    %9 = arith.mulf %7, %8 : vector<32x128xbf16>
    %c0_5 = arith.constant 0 : index
    %c0_6 = arith.constant 0 : index
    %10 = vector.load %arg5[%c0_5, %c0_6] : memref<32x128xbf16, #tpu.memory_space<vmem>>, vector<32x128xbf16>
    tpu.vector_store %arg5[%c0_5, %c0_6], %9 {strides = array<i32>} : memref<32x128xbf16, #tpu.memory_space<vmem>>, vector<32x128xbf16>,
    return
  }
  func.func @transform_0(%arg0: i32, %arg1: i32) -> (i32, i32) {
    %c0_i32 = arith.constant 0 : i32
    return %arg0, %arg1 : i32, i32
  }
  func.func @transform_1(%arg0: i32, %arg1: i32) -> (i32, i32) {
    %c0_i32 = arith.constant 0 : i32
    %c0_i32_0 = arith.constant 0 : i32
    return %arg0, %c0_i32 : i32, i32
  }
  func.func @transform_2(%arg0: i32, %arg1: i32) -> (i32, i32) {
    %c0_i32 = arith.constant 0 : i32
    %c0_i32_0 = arith.constant 0 : i32
    return %arg0, %c0_i32 : i32, i32
  }
  func.func @transform_3(%arg0: i32, %arg1: i32) -> (i32, i32) {
    %c0_i32 = arith.constant 0 : i32
    return %arg0, %arg1 : i32, i32
  }
}

</mosaic_0001>

<llo_original>
// kernel: tpu_custom_call.1
$region0: #{tpu_custom_call.1}
  #allocation0 [shape = 'u32[]', space=smem, size = 0x4, offset = 0x4, fixed_abs, tag = 'smem constant byte address 0x4 - core index']
  #allocation1 [shape = 'u32[144,128]{1,0:T(1,128)}', space=vmem, size = 0x12000, scoped, tag = 'internal scratch']
  %s0 = inlined_call_operand.vmem [shape: u8[64,256], index: 0, kind: input, shape index: {}]
  %s1 = inlined_call_operand.vmem [shape: f32[64,1], index: 1, kind: input, shape index: {}]
  %s2 = inlined_call_operand.vmem [shape: f32[64,1], index: 2, kind: input, shape index: {}]
  %s3 = inlined_call_operand.hbm [shape: bf16[64,256], index: 3, kind: output, shape index: {}]
  %s4 = sld [smem:[#allocation0]]
  $region45: #{tpu_custom_call.1} parent=0
    _
  %s6 = ssub.s32 1, %s4
  %s7 = scalar_select 0, %s6, %s4
  $region1: #{tpu_custom_call.1} parent=0
    #allocation2 [shape = 'u8[16384]{0}', space=vmem, size = 0x4000, scoped, tag = 'output window, operand 0']
    #allocation3 [shape = 's32[2]{0}', space=sflag, size = 0x8, scoped, tag = 'scoped memory for tpu_custom_call.1']
    %8 = vsyncpa [#allocation3], 0
    %s9 = scalar_lea.sflag [#allocation3], 1
    %10 = vsyncpa %s9, 0
    loop: start=0, step=1, limit=6
    $region2: #{tpu_custom_call.1} parent=1 // loop_pre_header
      _
    $region3: #{tpu_custom_call.1} parent=1 // loop_header
      %s12 = sphi 0, %s16
      %p13 = scmp.ge.s32.totalorder %s12, 6
      %s19 = sphi 0, %s31
      %s20 = sphi 0, %s27
      %s21 = sphi 0, %s19
      %s22 = sphi 0, %s20
      %s23 = sphi 0, %s21
      %s24 = sphi 0, %s22
      %s36 = sphi 0, %s38
      %s39 = sphi 0, %s36
      %s40 = sphi 0, %s39
      %s56 = sphi 0, %s40
      %s62 = sphi 0, %s64
      %s65 = sphi 0, %s62
      %s66 = sphi 0, %s65
      %s82 = sphi 0, %s66
      %s88 = sphi 0, %s90
      %s91 = sphi 0, %s88
      %s92 = sphi 0, %s91
      %s108 = sphi 0, %s92
      %s116 = sphi 0, %s118
      %s119 = sphi 0, %s116
      %s120 = sphi 0, %s119
      %s136 = sphi 0, %s120
    $region4: #{tpu_custom_call.1} parent=1 // loop_header_branch
      %15 = sbr.rel (%p13) target = $region8
    $region5: #{tpu_custom_call.1} parent=1 // loop_body
      %s17 = ssub.s32 %s12, 1
      %s18 = ssub.s32 %s12, 2
      %s25 = sadd.s32 1, %s20
      %p26 = scmp.ge.s32.totalorder %s25, 2
      %s27 = scalar_select %p26, 0, %s25
      %s28 = sadd.s32 1, %s19
      %s29 = scalar_select %p26, %s28, %s19
      %p30 = scmp.ge.s32.totalorder %s29, 2
      %s31 = scalar_select %p30, 0, %s29
      %s32 = ssub.s32 %s19, %s31
      %s33 = ssub.s32 %s20, %s27
      %s34 = sor.u32 %s32, %s33
      %p35 = scmp.eq.s32.totalorder %s34, 0
      %s37 = sadd.s32 %s36, 1
      %s38 = scalar_select %p35, %s36, %s37
      %p41 = pneg %p35
      %p42 = scmp.eq.s32.totalorder %s12, 3
      %p43 = por %p41, %p42
      %p44 = scmp.ne.s32.totalorder %s36, %s39
      %p45 = scmp.eq.s32.totalorder %s12, 0
      %p46 = por %p44, %p45
      %p47 = scmp.ne.s32.totalorder %s36, %s39
      %p48 = scmp.eq.s32.totalorder %s17, 3
      %p49 = por %p47, %p48
      %p50 = scmp.ne.s32.totalorder %s39, %s40
      %p51 = scmp.eq.s32.totalorder %s17, 0
      %p52 = por %p50, %p51
      %p53 = scmp.ne.s32.totalorder %s39, %s40
      %p54 = scmp.eq.s32.totalorder %s18, 3
      %p55 = por %p53, %p54
      %p57 = scmp.ne.s32.totalorder %s40, %s56
      %p58 = scmp.eq.s32.totalorder %s18, 0
      %p59 = por %p57, %p58
      %s60 = ssub.s32 %s19, %s31
      %p61 = scmp.eq.s32.totalorder %s60, 0
      %s63 = sadd.s32 %s62, 1
      %s64 = scalar_select %p61, %s62, %s63
      %p67 = pneg %p61
      %p68 = scmp.eq.s32.totalorder %s12, 3
      %p69 = por %p67, %p68
      %p70 = scmp.ne.s32.totalorder %s62, %s65
      %p71 = scmp.eq.s32.totalorder %s12, 0
      %p72 = por %p70, %p71
      %p73 = scmp.ne.s32.totalorder %s62, %s65
      %p74 = scmp.eq.s32.totalorder %s17, 3
      %p75 = por %p73, %p74
      %p76 = scmp.ne.s32.totalorder %s65, %s66
      %p77 = scmp.eq.s32.totalorder %s17, 0
      %p78 = por %p76, %p77
      %p79 = scmp.ne.s32.totalorder %s65, %s66
      %p80 = scmp.eq.s32.totalorder %s18, 3
      %p81 = por %p79, %p80
      %p83 = scmp.ne.s32.totalorder %s66, %s82
      %p84 = scmp.eq.s32.totalorder %s18, 0
      %p85 = por %p83, %p84
      %s86 = ssub.s32 %s19, %s31
      %p87 = scmp.eq.s32.totalorder %s86, 0
      %s89 = sadd.s32 %s88, 1
      %s90 = scalar_select %p87, %s88, %s89
      %p93 = pneg %p87
      %p94 = scmp.eq.s32.totalorder %s12, 3
      %p95 = por %p93, %p94
      %p96 = scmp.ne.s32.totalorder %s88, %s91
      %p97 = scmp.eq.s32.totalorder %s12, 0
      %p98 = por %p96, %p97
      %p99 = scmp.ne.s32.totalorder %s88, %s91
      %p100 = scmp.eq.s32.totalorder %s17, 3
      %p101 = por %p99, %p100
      %p102 = scmp.ne.s32.totalorder %s91, %s92
      %p103 = scmp.eq.s32.totalorder %s17, 0
      %p104 = por %p102, %p103
      %p105 = scmp.ne.s32.totalorder %s91, %s92
      %p106 = scmp.eq.s32.totalorder %s18, 3
      %p107 = por %p105, %p106
      %p109 = scmp.ne.s32.totalorder %s92, %s108
      %p110 = scmp.eq.s32.totalorder %s18, 0
      %p111 = por %p109, %p110
      %s112 = ssub.s32 %s19, %s31
      %s113 = ssub.s32 %s20, %s27
      %s114 = sor.u32 %s112, %s113
      %p115 = scmp.eq.s32.totalorder %s114, 0
      %s117 = sadd.s32 %s116, 1
      %s118 = scalar_select %p115, %s116, %s117
      %p121 = pneg %p115
      %p122 = scmp.eq.s32.totalorder %s12, 3
      %p123 = por %p121, %p122
      %p124 = scmp.ne.s32.totalorder %s116, %s119
      %p125 = scmp.eq.s32.totalorder %s12, 0
      %p126 = por %p124, %p125
      %p127 = scmp.ne.s32.totalorder %s116, %s119
      %p128 = scmp.eq.s32.totalorder %s17, 3
      %p129 = por %p127, %p128
      %p130 = scmp.ne.s32.totalorder %s119, %s120
      %p131 = scmp.eq.s32.totalorder %s17, 0
      %p132 = por %p130, %p131
      %p133 = scmp.ne.s32.totalorder %s119, %s120
      %p134 = scmp.eq.s32.totalorder %s18, 3
      %p135 = por %p133, %p134
      %p137 = scmp.ne.s32.totalorder %s120, %s136
      %p138 = scmp.eq.s32.totalorder %s18, 0
      %p139 = por %p137, %p138
      %p140 = scmp.le.s32.totalorder 1, %s12
      %p141 = scmp.lt.s32.totalorder %s12, 5
      %p142 = pnand %p140, %p141
      %p143 = pneg %p142
      // Predicated region
      $region9: #{tpu_custom_call.1} parent=5 // pred_check
        _
      $region10: #{tpu_custom_call.1} parent=5 // pred_check_branch
        %145 = sbr.rel (%p142) target = $region12
      $region11: #{tpu_custom_call.1} parent=5 // pred_region
        %s146 = ssub.s32 %s12, 1
      $region12: #{tpu_custom_call.1} parent=5 // pred_fallthru
        _
      %p147 = scmp.lt.s32.totalorder %s12, 4
      // Predicated region
      $region13: #{tpu_custom_call.1} parent=5 // pred_check
        %p148 = pneg %p147
      $region14: #{tpu_custom_call.1} parent=5 // pred_check_branch
        %150 = sbr.rel (%p148) target = $region16
      $region15: #{tpu_custom_call.1} parent=5 // pred_region
        // Predicated region
        $region17: #{tpu_custom_call.1} parent=15 // pred_check
          %p151 = pneg %p46
        $region18: #{tpu_custom_call.1} parent=15 // pred_check_branch
          %153 = sbr.rel (%p151) target = $region20
        $region19: #{tpu_custom_call.1} parent=15 // pred_region
          %p154 = scmp.lt.s32.totalorder %s19, 1
          %s155 = scalar_select %p154, %s19, 1
          %p156 = scmp.lt.s32.totalorder %s20, 1
          %s157 = scalar_select %p156, %s20, 1
          %s158 = smul.addr %s155, 2
          %s159 = sadd.s32 %s157, %s158
          %s160 = smul.addr %s159, 8
          %s161 = scalar_lea.vmem %s0, %s160
        $region20: #{tpu_custom_call.1} parent=15 // pred_fallthru
          _
        // Predicated region
        $region21: #{tpu_custom_call.1} parent=15 // pred_check
          %p162 = pneg %p72
        $region22: #{tpu_custom_call.1} parent=15 // pred_check_branch
          %164 = sbr.rel (%p162) target = $region24
        $region23: #{tpu_custom_call.1} parent=15 // pred_region
          %s165 = smul.u32 4, %s19
          %p166 = scmp.lt.s32.totalorder %s165, 7
          %s167 = scalar_select %p166, %s165, 7
          %s168 = smul.addr %s167, 8
          %s169 = scalar_lea.vmem %s1, %s168
          %s170 = smul.u32 4, %s19
        $region24: #{tpu_custom_call.1} parent=15 // pred_fallthru
          _
        // Predicated region
        $region25: #{tpu_custom_call.1} parent=15 // pred_check
          %p171 = pneg %p98
        $region26: #{tpu_custom_call.1} parent=15 // pred_check_branch
          %173 = sbr.rel (%p171) target = $region28
        $region27: #{tpu_custom_call.1} parent=15 // pred_region
          %s174 = smul.u32 4, %s19
          %p175 = scmp.lt.s32.totalorder %s174, 7
          %s176 = scalar_select %p175, %s174, 7
          %s177 = smul.addr %s176, 8
          %s178 = scalar_lea.vmem %s2, %s177
          %s179 = smul.u32 4, %s19
        $region28: #{tpu_custom_call.1} parent=15 // pred_fallthru
          _
      $region16: #{tpu_custom_call.1} parent=5 // pred_fallthru
        _
      %p180 = scmp.le.s32.totalorder 1, %s12
      %p181 = scmp.lt.s32.totalorder %s12, 5
      %p182 = pnand %p180, %p181
      %p183 = pneg %p182
      // Predicated region
      $region29: #{tpu_custom_call.1} parent=5 // pred_check
        _
      $region30: #{tpu_custom_call.1} parent=5 // pred_check_branch
        %185 = sbr.rel (%p182) target = $region32
      $region31: #{tpu_custom_call.1} parent=5 // pred_region
        %s186 = ssub.s32 %s12, 1
        %p187 = scmp.lt.s32.totalorder %s21, 1
        %s188 = scalar_select %p187, %s21, 1
        %p189 = scmp.lt.s32.totalorder %s22, 1
        %s190 = scalar_select %p189, %s22, 1
        %s191 = smul.addr %s188, 2
        %s192 = sadd.s32 %s190, %s191
        %s193 = smul.addr %s192, 8
        %s194 = scalar_lea.vmem %s0, %s193
        %p195 = pneg %p52
        %p196 = pneg %p49
        %s197 = smul.u32 4, %s21
        %p198 = scmp.lt.s32.totalorder %s197, 7
        %s199 = scalar_select %p198, %s197, 7
        %s200 = smul.addr %s199, 8
        %s201 = scalar_lea.vmem %s1, %s200
        %p202 = pneg %p78
        %p203 = pneg %p75
        %s204 = smul.u32 4, %s21
        %p205 = scmp.lt.s32.totalorder %s204, 7
        %s206 = scalar_select %p205, %s204, 7
        %s207 = smul.addr %s206, 8
        %s208 = scalar_lea.vmem %s2, %s207
        %p209 = pneg %p104
        %p210 = pneg %p101
        %p211 = pneg %p132
        %p212 = pneg %p129
        %s213 = sand.u32 %s119, 1
        %s214 = scalar_lea.sflag [#allocation3], %s213
        %s215 = sand.u32 %s119, 1
        %s216 = smul.addr %s215, 16
        %s217 = scalar_lea.vmem [#allocation2], %s216
        %p218 = scmp.lt.s32.totalorder %s21, 1
        %s219 = scalar_select %p218, %s21, 1
        %p220 = scmp.lt.s32.totalorder %s22, 1
        %s221 = scalar_select %p220, %s22, 1
        %s222 = smul.addr %s219, 2
        %s223 = sadd.s32 %s221, %s222
        %s224 = smul.addr %s223, 8
        %s225 = scalar_lea.vmem %s0, %s224
        %s226 = smul.u32 4, %s21
        %p227 = scmp.lt.s32.totalorder %s226, 7
        %s228 = scalar_select %p227, %s226, 7
        %s229 = smul.addr %s228, 8
        %s230 = scalar_lea.vmem %s1, %s229
        %s231 = smul.u32 4, %s21
        %s232 = smul.u32 4, %s21
        %p233 = scmp.lt.s32.totalorder %s232, 7
        %s234 = scalar_select %p233, %s232, 7
        %s235 = smul.addr %s234, 8
        %s236 = scalar_lea.vmem %s2, %s235
        %s237 = smul.u32 4, %s21
        %s238 = smul.u32 4, %s21
        %v239 = vld [vmem:[%s225] sm:$0xff]
        %v240 = vunpack.c.l.u8.bf16 %v239
        %v241 = vunpack.c.h.u8.bf16 %v239
        %v242 = vld [vmem:[%s236] sm:$0xff]
        %v243 = vld [vmem:[%s236 + $0x8] sm:$0xff]
        %v244 = vld [vmem:[%s236 + $0x10] sm:$0xff]
        %v245 = vld [vmem:[%s236 + $0x18] sm:$0xff]
        %v246 = vpack.c.bf16 %v243, %v242
        %v247 = vpack.c.bf16 %v245, %v244
        %v248 = vld [vmem:[%s230] sm:$0xff]
        %v249 = vld [vmem:[%s230 + $0x8] sm:$0xff]
        %v250 = vld [vmem:[%s230 + $0x10] sm:$0xff]
        %v251 = vld [vmem:[%s230 + $0x18] sm:$0xff]
        %v252 = vpack.c.bf16 %v249, %v248
        %v253 = vpack.c.bf16 %v251, %v250
        %255 = vset.pattern.permute.xlu0 0
        %256 = vperm.xlu0 %255, %v246
        %v257 = vpop.permute.xlu0 %256
        %260 = vset.pattern.permute.xlu0 0
        %261 = vperm.xlu0 %260, %v247
        %v262 = vpop.permute.xlu0 %261
        %v264 = vsub.bf16 %v240, %v257
        %v265 = vsub.bf16 %v241, %v262
        %267 = vset.pattern.permute.xlu0 0
        %268 = vperm.xlu0 %267, %v252
        %v269 = vpop.permute.xlu0 %268
        %272 = vset.pattern.permute.xlu0 0
        %273 = vperm.xlu0 %272, %v253
        %v274 = vpop.permute.xlu0 %273
        %v276 = vmul.bf16 %v264, %v269
        %v277 = vmul.bf16 %v265, %v274
        %v280 = vunpack.c.l.b16 %v276
        %v281 = vunpack.c.h.b16 %v276
        %v282 = vunpack.c.l.b16 %v277
        %v283 = vunpack.c.h.b16 %v277
        %v284 = vpack.c.b16 %v280, %v280
        %v285 = vpack.c.b16 %v281, %v281
        %v286 = vpack.c.b16 %v282, %v282
        %v287 = vpack.c.b16 %v283, %v283
        %292 = vst [vmem:[%s217] sm:$0xf] %v284
        %293 = vst [vmem:[%s217 + $0x4] sm:$0xf] %v285
        %294 = vst [vmem:[%s217 + $0x8] sm:$0xf] %v286
        %295 = vst [vmem:[%s217 + $0xc] sm:$0xf] %v287
        %s296 = sand.u32 %s119, 1
        %s297 = scalar_lea.sflag [#allocation3], %s296
        %s298 = sand.u32 %s119, 1
        %s299 = smul.addr %s298, 16
        %s300 = scalar_lea.vmem [#allocation2], %s299
        // Predicated region
        $region33: #{tpu_custom_call.1} parent=31 // pred_check
          %p301 = pneg %p129
        $region34: #{tpu_custom_call.1} parent=31 // pred_check_branch
          %303 = sbr.rel (%p301) target = $region36
        $region35: #{tpu_custom_call.1} parent=31 // pred_region
          %s304 = smul.u32 4, %s21
          %s306 = ssub.s32 256, 256
          %307 = vsyncadd %s297, %s306
          %s308 = smul.addr %s304, 2
          %s309 = sadd.s32 %s22, %s308
          %s310 = smul.addr %s309, 64
          %s311 = scalar_lea.hbm %s3, %s310
          %s312 = sshll.u32 %s300, 4
          %s313 = int_to_ptr.vmem [resolvable:$true] %s312
          %318 = dma.vmem_to_hbm [thread:$0]  %s313, 256, %s311, %s297, 64, 128, 4
        $region36: #{tpu_custom_call.1} parent=31 // pred_fallthru
          _
      $region32: #{tpu_custom_call.1} parent=5 // pred_fallthru
        _
      %p319 = scmp.le.s32.totalorder 2, %s12
      // Predicated region
      $region37: #{tpu_custom_call.1} parent=5 // pred_check
        %p320 = pneg %p319
      $region38: #{tpu_custom_call.1} parent=5 // pred_check_branch
        %322 = sbr.rel (%p320) target = $region40
      $region39: #{tpu_custom_call.1} parent=5 // pred_region
        %s323 = ssub.s32 %s12, 2
        // Predicated region
        $region41: #{tpu_custom_call.1} parent=39 // pred_check
          %p324 = pneg %p135
        $region42: #{tpu_custom_call.1} parent=39 // pred_check_branch
          %326 = sbr.rel (%p324) target = $region44
        $region43: #{tpu_custom_call.1} parent=39 // pred_region
          %s327 = sand.u32 %s120, 1
          %s328 = scalar_lea.sflag [#allocation3], %s327
          %s329 = sand.u32 %s120, 1
          %s330 = smul.addr %s329, 16
          %s331 = scalar_lea.vmem [#allocation2], %s330
          %332 = dma.done %s328, 256
        $region44: #{tpu_custom_call.1} parent=39 // pred_fallthru
          _
      $region40: #{tpu_custom_call.1} parent=5 // pred_fallthru
        _
    $region6: #{tpu_custom_call.1} parent=1 // loop_footer
      %s16 = sadd.s32 1, %s12
    $region7: #{tpu_custom_call.1} parent=1 // loop_footer_branch
      %11 = sbr.rel target = $region3
    $region8: #{tpu_custom_call.1} parent=1 // loop_exit
      _
    %333 = vsyncpa [#allocation3], 1
    %s334 = scalar_lea.sflag [#allocation3], 1
    %335 = vsyncpa %s334, 1

</llo_original>
